<compile_context>
chip_gen: v7x
topology: tpu7x:2x2x1
jax: 0.10.0
libtpu: 0.0.40
codegen_flags: <defaults>
</compile_context>

<pallas_src>
import jax
import jax.numpy as jnp
from jax.experimental import pallas as pl
from jax.experimental.pallas import tpu as pltpu

_LANES = 128
_ACC_ROWS = 256  # fixed small resident accumulator height (multiple of 8)


def _round_down(a, b):
    return (a // b) * b


def _default_num_slices():
    """One grid 'slice' per TensorCore: 2 on v7x, 1 on v5e/v6e (and fallback)."""
    try:
        kind = jax.devices()[0].device_kind.lower()
    except Exception:
        return 1
    return 2 if ("v7" in kind or "7x" in kind) else 1


def _mre_partial_kernel(y_ref, yh_ref, acc_ref):
    # acc_ref is the output block, resident across the (arbitrary) row-tile axis.
    @pl.when(pl.program_id(1) == 0)
    def _():
        acc_ref[...] = jnp.zeros_like(acc_ref)

    acc_rows = acc_ref.shape[0]
    k = y_ref.shape[0] // acc_rows  # sublane-aligned chunks per input tile

    def chunk(j):
        # Cast in-kernel (halves HBM traffic for sub-32-bit inputs).
        y = y_ref[pl.ds(j * acc_rows, acc_rows), :].astype(jnp.float32)
        yh = yh_ref[pl.ds(j * acc_rows, acc_rows), :].astype(jnp.float32)
        # (y - yh) * recip(yh): EUP approx reciprocal + one Newton-Raphson step
        # keeps ~f32 accuracy while freeing the VALU slot.
        # (Note: yh == 0 propagates non-finite values, matching the spirit of the
        #  reference divide; finite inputs are assumed.)
        r = pl.reciprocal(yh, approx=True)
        r = r * (2.0 - yh * r)
        return (y - yh) * r

    upd = chunk(0)
    for j in range(1, k):
        upd = upd + chunk(j)
    acc_ref[...] += upd


def loss_mre(y, y_hat, *, max_tile_rows=4096, num_slices=None):
    """mean((y - y_hat) / y_hat): bulk elementwise + reduction in Pallas."""
    assert y.shape == y_hat.shape, (y.shape, y_hat.shape)
    n = y.size
    out_dtype = jnp.result_type(y.dtype, y_hat.dtype)

    if num_slices is None:
        num_slices = _default_num_slices()
    num_slices = max(1, int(num_slices))

    # Free reshapes (contiguous), no dtype cast, no padding copies.
    y_flat = y.reshape(-1)
    yh_flat = y_hat.reshape(-1)

    # Sublane granule: 8 for 32-bit inputs, 16 if any input is sub-32-bit.
    min_itemsize = min(jnp.dtype(y.dtype).itemsize, jnp.dtype(y_hat.dtype).itemsize)
    granule = 8 if min_itemsize >= 4 else 16

    rows = n // _LANES
    if rows // num_slices < granule:
        num_slices = 1

    tile_rows = min(max_tile_rows, _round_down(rows // num_slices, granule))
    if tile_rows >= _ACC_ROWS:
        tile_rows = _round_down(tile_rows, _ACC_ROWS)
        acc_rows = _ACC_ROWS
    else:
        acc_rows = tile_rows  # may be 0 for tiny inputs

    if tile_rows == 0:
        # Too small for even one aligned tile: pure-XLA path.
        yf = y_flat.astype(jnp.float32)
        yhf = yh_flat.astype(jnp.float32)
        return (jnp.sum((yf - yhf) / yhf) / n).astype(out_dtype)

    steps = (rows // num_slices) // tile_rows
    rows_per_slice = steps * tile_rows
    main_rows = num_slices * rows_per_slice
    main_elems = main_rows * _LANES

    y_main = y_flat[:main_elems].reshape(num_slices, rows_per_slice, _LANES)
    yh_main = yh_flat[:main_elems].reshape(num_slices, rows_per_slice, _LANES)

    in_spec = pl.BlockSpec((None, tile_rows, _LANES), lambda c, i: (c, i, 0))
    out_spec = pl.BlockSpec((None, acc_rows, _LANES), lambda c, i: (c, 0, 0))

    partial = pl.pallas_call(
        _mre_partial_kernel,
        out_shape=jax.ShapeDtypeStruct((num_slices, acc_rows, _LANES), jnp.float32),
        grid=(num_slices, steps),
        in_specs=[in_spec, in_spec],
        out_specs=out_spec,
        compiler_params=pltpu.CompilerParams(
            dimension_semantics=("parallel", "arbitrary"),
            # Big tiles + double-buffered inputs can exceed v5e's 16 MiB default
            # scoped VMEM; actual usage stays far below this limit.
            vmem_limit_bytes=64 * 1024 * 1024,
        ),
    )(y_main, yh_main)

    total = jnp.sum(partial)

    # Unaligned tail (< num_slices * tile_rows * 128 elements): tiny XLA sum.
    if main_elems < n:
        y_tail = y_flat[main_elems:].astype(jnp.float32)
        yh_tail = yh_flat[main_elems:].astype(jnp.float32)
        total = total + jnp.sum((y_tail - yh_tail) / yh_tail)

    return (total / n).astype(out_dtype)


def loss_mre_reference(y, y_hat):
    y = y.astype(jnp.float32)
    y_hat = y_hat.astype(jnp.float32)
    return jnp.mean((y - y_hat) / y_hat)


if __name__ == "__main__":
    key = jax.random.PRNGKey(0)
    keys = jax.random.split(key, 8)

    def make(kA, kB, shape):
        y_hat = jax.random.uniform(kA, shape, jnp.float32, 0.5, 1.5)
        y = y_hat * (1.0 + 0.1 * jax.random.normal(kB, shape, jnp.float32))
        return y, y_hat

    def check(y, y_hat, **kw):
        out = jax.block_until_ready(loss_mre(y, y_hat, **kw))
        ref = loss_mre_reference(y, y_hat)
        assert out.shape == (), out.shape
        assert jnp.allclose(out, ref, atol=1e-5, rtol=1e-5), (out, ref)

    # Case 1: small 4-D tensor (batch=2, channels=4, 16x16) -- pure kernel path.
    y1, yh1 = make(keys[0], keys[1], (2, 4, 16, 16))
    check(y1, yh1)

    # Case 2: tiny ragged tensor -- exercises the pure-XLA fallback.
    y2, yh2 = make(keys[2], keys[3], (3, 5, 7))
    check(y2, yh2)

    # Case 3: ragged element count -- kernel on the aligned prefix + XLA tail.
    y3, yh3 = make(keys[4], keys[5], (5, 1000))
    check(y3, yh3)

    # Case 4: multi-step reduction with chunked accumulator (steps > 1, k > 1).
    y4, yh4 = make(keys[6], keys[7], (64, 4096))
    check(y4, yh4, max_tile_rows=512)

    print("KERNEL_OK")
</pallas_src>

<mosaic_0001>
module attributes {stable_mosaic.version = 11 : i64} {
  func.func @_mre_partial_kernel(%arg0: i32, %arg1: i32, %arg2: memref<1x16x128xf32, #tpu.memory_space<vmem>>, %arg3: memref<1x16x128xf32, #tpu.memory_space<vmem>>, %arg4: memref<1x16x128xf32, #tpu.memory_space<vmem>>) attributes {dimension_semantics = [#tpu.dimension_semantics<parallel>, #tpu.dimension_semantics<arbitrary>], iteration_bounds = array<i64: 1, 1>, scalar_prefetch = 0 : i64, scratch_operands = 0 : i64, tpu.core_type = #tpu.core_type<tc>, window_params = [{transform_indices = @transform_0, window_bounds = array<i64: 1, 16, 128>}, {transform_indices = @transform_1, window_bounds = array<i64: 1, 16, 128>}, {transform_indices = @transform_2, window_bounds = array<i64: 1, 16, 128>}]} {
    %c0_i32 = arith.constant 0 : i32
    %0 = arith.cmpi eq, %arg1, %c0_i32 : i32
    %1 = arith.extui %0 : i1 to i32
    %c0_i32_0 = arith.constant 0 : i32
    %2 = arith.cmpi ne, %1, %c0_i32_0 : i32
    scf.if %2 {
      %cst_12 = arith.constant 0.000000e+00 : f32
      %20 = vector.broadcast %cst_12 : f32 to vector<16x128xf32>
      %c0_13 = arith.constant 0 : index
      %c0_14 = arith.constant 0 : index
      %c0_15 = arith.constant 0 : index
      %21 = vector.load %arg4[%c0_13, %c0_14, %c0_15] : memref<1x16x128xf32, #tpu.memory_space<vmem>>, vector<1x16x128xf32>
      %22 = vector.shape_cast %21 : vector<1x16x128xf32> to vector<16x128xf32>
      %23 = vector.shape_cast %20 : vector<16x128xf32> to vector<1x16x128xf32>
      tpu.vector_store %arg4[%c0_13, %c0_14, %c0_15], %23 {strides = array<i32>} : memref<1x16x128xf32, #tpu.memory_space<vmem>>, vector<1x16x128xf32>,
    } else {
    }
    %c0 = arith.constant 0 : index
    %c0_1 = arith.constant 0 : index
    %c0_2 = arith.constant 0 : index
    %3 = vector.load %arg2[%c0, %c0_1, %c0_2] : memref<1x16x128xf32, #tpu.memory_space<vmem>>, vector<1x16x128xf32>
    %4 = vector.shape_cast %3 : vector<1x16x128xf32> to vector<16x128xf32>
    %c0_3 = arith.constant 0 : index
    %c0_4 = arith.constant 0 : index
    %c0_5 = arith.constant 0 : index
    %5 = vector.load %arg3[%c0_3, %c0_4, %c0_5] : memref<1x16x128xf32, #tpu.memory_space<vmem>>, vector<1x16x128xf32>
    %6 = vector.shape_cast %5 : vector<1x16x128xf32> to vector<16x128xf32>
    %7 = tpu.reciprocal %6 {approx = true} : vector<16x128xf32> -> vector<16x128xf32>
    %8 = arith.mulf %6, %7 : vector<16x128xf32>
    %cst = arith.constant 2.000000e+00 : f32
    %9 = vector.broadcast %cst : f32 to vector<16x128xf32>
    %10 = arith.subf %9, %8 : vector<16x128xf32>
    %11 = arith.mulf %7, %10 : vector<16x128xf32>
    %12 = arith.subf %4, %6 : vector<16x128xf32>
    %13 = arith.mulf %12, %11 : vector<16x128xf32>
    %c0_6 = arith.constant 0 : index
    %c0_7 = arith.constant 0 : index
    %c0_8 = arith.constant 0 : index
    %14 = vector.load %arg4[%c0_6, %c0_7, %c0_8] : memref<1x16x128xf32, #tpu.memory_space<vmem>>, vector<1x16x128xf32>
    %15 = vector.shape_cast %14 : vector<1x16x128xf32> to vector<16x128xf32>
    %16 = arith.addf %15, %13 : vector<16x128xf32>
    %c0_9 = arith.constant 0 : index
    %c0_10 = arith.constant 0 : index
    %c0_11 = arith.constant 0 : index
    %17 = vector.load %arg4[%c0_9, %c0_10, %c0_11] : memref<1x16x128xf32, #tpu.memory_space<vmem>>, vector<1x16x128xf32>
    %18 = vector.shape_cast %17 : vector<1x16x128xf32> to vector<16x128xf32>
    %19 = vector.shape_cast %16 : vector<16x128xf32> to vector<1x16x128xf32>
    tpu.vector_store %arg4[%c0_9, %c0_10, %c0_11], %19 {strides = array<i32>} : memref<1x16x128xf32, #tpu.memory_space<vmem>>, vector<1x16x128xf32>,
    return
  }
  func.func @transform_0(%arg0: i32, %arg1: i32) -> (i32, i32, i32) {
    %c0_i32 = arith.constant 0 : i32
    %c0_i32_0 = arith.constant 0 : i32
    return %arg0, %arg1, %c0_i32 : i32, i32, i32
  }
  func.func @transform_1(%arg0: i32, %arg1: i32) -> (i32, i32, i32) {
    %c0_i32 = arith.constant 0 : i32
    %c0_i32_0 = arith.constant 0 : i32
    return %arg0, %arg1, %c0_i32 : i32, i32, i32
  }
  func.func @transform_2(%arg0: i32, %arg1: i32) -> (i32, i32, i32) {
    %c0_i32 = arith.constant 0 : i32
    %c0_i32_0 = arith.constant 0 : i32
    %c0_i32_1 = arith.constant 0 : i32
    return %arg0, %c0_i32, %c0_i32_0 : i32, i32, i32
  }
}

</mosaic_0001>

<llo_original>
// kernel: tpu_custom_call.1
$region0: #{tpu_custom_call.1}
  #allocation0 [shape = 'u32[]', space=smem, size = 0x4, offset = 0x4, fixed_abs, tag = 'smem constant byte address 0x4 - core index']
  #allocation1 [shape = 'u32[144,128]{1,0:T(1,128)}', space=vmem, size = 0x12000, scoped, tag = 'internal scratch']
  %s0 = inlined_call_operand.hbm [shape: f32[1,16,128], index: 0, kind: input, shape index: {}]
  %s1 = inlined_call_operand.hbm [shape: f32[1,16,128], index: 1, kind: input, shape index: {}]
  %s2 = inlined_call_operand.hbm [shape: f32[1,16,128], index: 2, kind: output, shape index: {}]
  %s3 = sld [smem:[#allocation0]]
  $region30: #{tpu_custom_call.1} parent=0
    _
  %s5 = ssub.s32 1, %s3
  %s6 = scalar_select 0, %s5, %s3
  $region1: #{tpu_custom_call.1} parent=0
    #allocation2 [shape = 'u8[8192]{0}', space=vmem, size = 0x2000, scoped, tag = 'input window, operand 0, single buffered']
    #allocation3 [shape = 's32[1]{0}', space=sflag, size = 0x4, scoped, tag = 'scoped memory for tpu_custom_call.1']
    #allocation4 [shape = 's32[1]{0}', space=sflag, size = 0x4, scoped, tag = 'scoped memory for tpu_custom_call.1']
    #allocation5 [shape = 'u8[8192]{0}', space=vmem, size = 0x2000, scoped, tag = 'input window, operand 1, single buffered']
    #allocation6 [shape = 's32[1]{0}', space=sflag, size = 0x4, scoped, tag = 'scoped memory for tpu_custom_call.1']
    #allocation7 [shape = 'u8[8192]{0}', space=vmem, size = 0x2000, scoped, tag = 'output window, operand 0, single buffered']
    %7 = vsyncpa [#allocation3], 0
    %8 = vsyncpa [#allocation6], 0
    %9 = vsyncpa [#allocation4], 0
    // Predicated region
    $region2: #{tpu_custom_call.1} parent=1 // pred_check
      _
    $region3: #{tpu_custom_call.1} parent=1 // pred_check_branch
      %11 = sbr.rel (0) target = $region5
    $region4: #{tpu_custom_call.1} parent=1 // pred_region
      %s13 = ssub.s32 256, 256
      %14 = vsyncadd [#allocation3], %s13
      %s15 = sshll.u32 [#allocation2], 4
      %s16 = int_to_ptr.vmem [resolvable:$true] %s15
      %21 = dma.hbm_to_vmem [thread:$0]  %s0, 256, %s16, [#allocation3], 128, 128, 8
    $region5: #{tpu_custom_call.1} parent=1 // pred_fallthru
      _
    // Predicated region
    $region6: #{tpu_custom_call.1} parent=1 // pred_check
      _
    $region7: #{tpu_custom_call.1} parent=1 // pred_check_branch
      %23 = sbr.rel (0) target = $region9
    $region8: #{tpu_custom_call.1} parent=1 // pred_region
      %s25 = ssub.s32 256, 256
      %26 = vsyncadd [#allocation6], %s25
      %s27 = sshll.u32 [#allocation5], 4
      %s28 = int_to_ptr.vmem [resolvable:$true] %s27
      %33 = dma.hbm_to_vmem [thread:$0]  %s1, 256, %s28, [#allocation6], 128, 128, 8
    $region9: #{tpu_custom_call.1} parent=1 // pred_fallthru
      _
    // Predicated region
    $region10: #{tpu_custom_call.1} parent=1 // pred_check
      _
    $region11: #{tpu_custom_call.1} parent=1 // pred_check_branch
      %35 = sbr.rel (0) target = $region13
    $region12: #{tpu_custom_call.1} parent=1 // pred_region
      %36 = dma.done [#allocation3], 256
    $region13: #{tpu_custom_call.1} parent=1 // pred_fallthru
      _
    // Predicated region
    $region14: #{tpu_custom_call.1} parent=1 // pred_check
      _
    $region15: #{tpu_custom_call.1} parent=1 // pred_check_branch
      %38 = sbr.rel (0) target = $region17
    $region16: #{tpu_custom_call.1} parent=1 // pred_region
      %39 = dma.done [#allocation6], 256
    $region17: #{tpu_custom_call.1} parent=1 // pred_fallthru
      _
    %p40 = scmp.eq.s32.totalorder 0, 0
    // Predicated region
    $region18: #{tpu_custom_call.1} parent=1 // pred_check
      %p41 = pneg %p40
    $region19: #{tpu_custom_call.1} parent=1 // pred_check_branch
      %43 = sbr.rel (%p41) target = $region21
    $region20: #{tpu_custom_call.1} parent=1 // pred_region
      %44 = vst [vmem:[#allocation7] sm:$0xff] 0.0
      %45 = vst [vmem:[#allocation7 + $0x8] sm:$0xff] 0.0
    $region21: #{tpu_custom_call.1} parent=1 // pred_fallthru
      _
    %v46 = vld [vmem:[#allocation2] sm:$0xff]
    %v47 = vld [vmem:[#allocation2 + $0x8] sm:$0xff]
    %v48 = vld [vmem:[#allocation5] sm:$0xff]
    %v49 = vld [vmem:[#allocation5 + $0x8] sm:$0xff]
    %v50 = vrcp.pop %v48
    %v51 = vrcp.pop %v49
    %v52 = vmul.f32 %v48, %v50
    %v53 = vmul.f32 %v49, %v51
    %v54 = vsub.f32 2.0, %v52
    %v55 = vsub.f32 2.0, %v53
    %v56 = vmul.f32 %v50, %v54
    %v57 = vmul.f32 %v51, %v55
    %v58 = vsub.f32 %v46, %v48
    %v59 = vsub.f32 %v47, %v49
    %v60 = vmul.f32 %v58, %v56
    %v61 = vmul.f32 %v59, %v57
    %v62 = vld [vmem:[#allocation7] sm:$0xff]
    %v63 = vld [vmem:[#allocation7 + $0x8] sm:$0xff]
    %v64 = vadd.f32 %v62, %v60
    %v65 = vadd.f32 %v63, %v61
    %66 = vst [vmem:[#allocation7] sm:$0xff] %v64
    %67 = vst [vmem:[#allocation7 + $0x8] sm:$0xff] %v65
    // Predicated region
    $region22: #{tpu_custom_call.1} parent=1 // pred_check
      _
    $region23: #{tpu_custom_call.1} parent=1 // pred_check_branch
      %69 = sbr.rel (0) target = $region25
    $region24: #{tpu_custom_call.1} parent=1 // pred_region
      %s71 = ssub.s32 256, 256
      %72 = vsyncadd [#allocation4], %s71
      %s73 = sshll.u32 [#allocation7], 4
      %s74 = int_to_ptr.vmem [resolvable:$true] %s73
      %79 = dma.vmem_to_hbm [thread:$0]  %s74, 256, %s2, [#allocation4], 128, 128, 8
    $region25: #{tpu_custom_call.1} parent=1 // pred_fallthru
      _
    // Predicated region
    $region26: #{tpu_custom_call.1} parent=1 // pred_check
      _
    $region27: #{tpu_custom_call.1} parent=1 // pred_check_branch
      %81 = sbr.rel (0) target = $region29
    $region28: #{tpu_custom_call.1} parent=1 // pred_region
      %82 = dma.done [#allocation4], 256
    $region29: #{tpu_custom_call.1} parent=1 // pred_fallthru
      _
    %83 = vsyncpa [#allocation3], 1
    %84 = vsyncpa [#allocation6], 1
    %85 = vsyncpa [#allocation4], 1

</llo_original>
